<compile_context>
chip_gen: v5e
topology: v5e:2x2
jax: 0.10.0
libtpu: 0.0.40
codegen_flags: <defaults>
</compile_context>

<pallas_src>
import jax
import jax.numpy as jnp
from jax.experimental import pallas as pl
from jax.experimental.pallas import tpu as pltpu

_NUM_BITS = 8
_MAX_BOUND = 2.0 ** (_NUM_BITS - 1) - 1.0          # 127.0
_EPSILON = 1.0 / (1 << 24)

_LANE = 128
_SUB = 8
_TILE_ROWS = 2048   # 2048 x 128 x 4B = 1 MiB per f32 block; x2 (double-buffer) x2 (in+out) = 4 MiB VMEM


def _fakequant_kernel(scales_ref, x_ref, o_ref):
    # scales_ref: SMEM f32[2] = [scale_q (0 if amax tiny), 1/scale_d (1 if amax tiny)]
    scale_q = scales_ref[0]
    inv_scale = scales_ref[1]
    x = x_ref[...].astype(jnp.float32)
    q = jnp.clip(jnp.round(x * scale_q), -_MAX_BOUND, _MAX_BOUND)
    o_ref[...] = (q * inv_scale).astype(o_ref.dtype)


@jax.jit
def tensor_quantizer_forward(x, amax):
    """Fake-quantize `x` with scalar `amax` (TensorQuantizer.forward)."""
    orig_shape = x.shape
    orig_dtype = x.dtype

    # Hoisted scalar math (done once per call, not per grid step).
    amax = jnp.asarray(amax, dtype=jnp.float32)
    is_tiny = amax <= _EPSILON
    scale_q = jnp.where(is_tiny, jnp.float32(0.0), jnp.float32(_MAX_BOUND) / amax)
    scale_d = jnp.where(is_tiny, jnp.float32(1.0), jnp.float32(_MAX_BOUND) / amax)
    inv_scale = jnp.float32(1.0) / scale_d          # exact f32 reciprocal, computed once
    scales = jnp.stack([scale_q, inv_scale]).astype(jnp.float32)

    # Flatten to a lane-dense 2D slab.  Only materialize a padding copy when the flat
    # size is not already a multiple of (8 * 128).
    flat = x.reshape(-1)
    n = flat.shape[0]
    chunk = _LANE * _SUB
    padded = ((n + chunk - 1) // chunk) * chunk
    if padded != n:
        # TODO(synk): a masked final-block store would avoid this extra HBM copy.
        flat = jnp.pad(flat, (0, padded - n))
    rows = padded // _LANE
    tile_rows = min(_TILE_ROWS, rows)               # rows is a multiple of 8, so tile_rows is too
    grid = (pl.cdiv(rows, tile_rows),)
    x2d = flat.reshape(rows, _LANE)

    out2d = pl.pallas_call(
        _fakequant_kernel,
        out_shape=jax.ShapeDtypeStruct((rows, _LANE), orig_dtype),
        grid=grid,
        in_specs=[
            pl.BlockSpec(memory_space=pltpu.SMEM),                  # [scale_q, 1/scale_d]
            pl.BlockSpec((tile_rows, _LANE), lambda i: (i, 0)),     # streamed input tile
        ],
        out_specs=pl.BlockSpec((tile_rows, _LANE), lambda i: (i, 0)),
        compiler_params=pltpu.CompilerParams(
            dimension_semantics=("parallel",),      # shard blocks across v7x's 2 TCs
        ),
    )(scales, x2d)

    out_flat = out2d.reshape(-1)
    if padded != n:
        out_flat = out_flat[:n]
    return out_flat.reshape(orig_shape)


class TensorQuantizer:
    """JAX/Pallas port of the PyTorch TensorQuantizer module."""

    def __init__(self, has_amax=True, **kwargs):
        # register_buffer('_amax', torch.tensor(1.0)) — deterministic init.
        self._amax = jnp.float32(1.0)
        self.scale = None

    def _get_amax(self):
        return self._amax

    def __call__(self, x):
        amax = self._get_amax()
        # Mirror the module: record the (post-fix-up) scale buffer.
        self.scale = jnp.where(amax <= _EPSILON,
                               jnp.float32(1.0),
                               jnp.float32(_MAX_BOUND) / amax)
        return tensor_quantizer_forward(x, amax)


def _reference(x, amax):
    # Plain-JAX reference of the PyTorch forward for verification.
    is_tiny = amax <= _EPSILON
    scale_q = jnp.where(is_tiny, 0.0, _MAX_BOUND / amax)
    scale_d = jnp.where(is_tiny, 1.0, _MAX_BOUND / amax)
    q = jnp.clip(jnp.round(x * scale_q), -_MAX_BOUND, _MAX_BOUND)
    return q / scale_d


if __name__ == "__main__":
    key = jax.random.PRNGKey(0)
    # Small NCHW activation, consistent with a conv/BERT activation tensor.
    x = jax.random.normal(key, (2, 4, 16, 16), dtype=jnp.float32) * 2.0

    quantizer = TensorQuantizer()
    out = jax.block_until_ready(quantizer(x))
    ref = _reference(x, quantizer._get_amax())
    assert out.shape == x.shape and out.dtype == x.dtype
    assert jnp.allclose(out, ref, atol=1e-6), "mismatch vs reference (aligned path)"

    # Exercise the multi-block grid path.
    x2 = jax.random.normal(jax.random.PRNGKey(1), (8, 64, 32, 32), dtype=jnp.float32) * 3.0
    out2 = jax.block_until_ready(tensor_quantizer_forward(x2, jnp.float32(1.0)))
    assert jnp.allclose(out2, _reference(x2, jnp.float32(1.0)), atol=1e-6), \
        "mismatch vs reference (multi-block path)"

    # Exercise the unaligned / padded path.
    x3 = jax.random.normal(jax.random.PRNGKey(2), (3, 5, 7, 11), dtype=jnp.float32)
    out3 = jax.block_until_ready(tensor_quantizer_forward(x3, jnp.float32(1.0)))
    assert out3.shape == x3.shape
    assert jnp.allclose(out3, _reference(x3, jnp.float32(1.0)), atol=1e-6), \
        "mismatch vs reference (padded path)"

    print("KERNEL_OK")
</pallas_src>

<mosaic_0001>
module attributes {stable_mosaic.version = 11 : i64} {
  func.func @_fakequant_kernel(%arg0: i32, %arg1: memref<2xf32, #tpu.memory_space<smem>>, %arg2: memref<16x128xf32, #tpu.memory_space<vmem>>, %arg3: memref<16x128xf32, #tpu.memory_space<vmem>>) attributes {dimension_semantics = [#tpu.dimension_semantics<parallel>], iteration_bounds = array<i64: 1>, scalar_prefetch = 0 : i64, scratch_operands = 0 : i64, tpu.core_type = #tpu.core_type<tc>, window_params = [{transform_indices = @transform_0, window_bounds = array<i64: 2>}, {transform_indices = @transform_1, window_bounds = array<i64: 16, 128>}, {transform_indices = @transform_2, window_bounds = array<i64: 16, 128>}]} {
    %c0 = arith.constant 0 : index
    %0 = memref.load %arg1[%c0] : memref<2xf32, #tpu.memory_space<smem>>
    %c1 = arith.constant 1 : index
    %1 = memref.load %arg1[%c1] : memref<2xf32, #tpu.memory_space<smem>>
    %c0_0 = arith.constant 0 : index
    %c0_1 = arith.constant 0 : index
    %2 = vector.load %arg2[%c0_0, %c0_1] : memref<16x128xf32, #tpu.memory_space<vmem>>, vector<16x128xf32>
    %3 = vector.broadcast %0 : f32 to vector<16x128xf32>
    %4 = arith.mulf %2, %3 : vector<16x128xf32>
    %5 = math.roundeven %4 : vector<16x128xf32>
    %cst = arith.constant -1.270000e+02 : f32
    %cst_2 = arith.constant 1.270000e+02 : f32
    %6 = vector.broadcast %cst : f32 to vector<16x128xf32>
    %7 = arith.maximumf %6, %5 : vector<16x128xf32>
    %8 = vector.broadcast %cst_2 : f32 to vector<16x128xf32>
    %9 = arith.minimumf %8, %7 : vector<16x128xf32>
    %10 = vector.broadcast %1 : f32 to vector<16x128xf32>
    %11 = arith.mulf %9, %10 : vector<16x128xf32>
    %c0_3 = arith.constant 0 : index
    %c0_4 = arith.constant 0 : index
    %12 = vector.load %arg3[%c0_3, %c0_4] : memref<16x128xf32, #tpu.memory_space<vmem>>, vector<16x128xf32>
    tpu.vector_store %arg3[%c0_3, %c0_4], %11 {strides = array<i32>} : memref<16x128xf32, #tpu.memory_space<vmem>>, vector<16x128xf32>,
    return
  }
  func.func @transform_0(%arg0: i32) -> i32 {
    %c0_i32 = arith.constant 0 : i32
    %c0_i32_0 = arith.constant 0 : i32
    return %c0_i32 : i32
  }
  func.func @transform_1(%arg0: i32) -> (i32, i32) {
    %c0_i32 = arith.constant 0 : i32
    %c0_i32_0 = arith.constant 0 : i32
    return %arg0, %c0_i32 : i32, i32
  }
  func.func @transform_2(%arg0: i32) -> (i32, i32) {
    %c0_i32 = arith.constant 0 : i32
    %c0_i32_0 = arith.constant 0 : i32
    return %arg0, %c0_i32 : i32, i32
  }
}

</mosaic_0001>

<llo_original>
// kernel: tensor_quantizer_forward.1
$region0: #{tensor_quantizer_forward.1}
  #allocation0 [shape = 'u32[]', space=smem, size = 0x4, offset = 0x4, fixed_abs, tag = 'smem constant byte address 0x4 - core index']
  #allocation1 [shape = 'u32[72,128]{1,0:T(1,128)}', space=vmem, size = 0x9000, scoped, tag = 'internal scratch']
  %s0 = inlined_call_operand.vmem [shape: f32[2], index: 0, kind: input, shape index: {}]
  %s1 = inlined_call_operand.vmem [shape: f32[16,128], index: 1, kind: input, shape index: {}]
  %s2 = inlined_call_operand.vmem [shape: f32[16,128], index: 2, kind: output, shape index: {}]
  %s3 = sld [smem:[#allocation0]]
  $region22: #{tensor_quantizer_forward.1} parent=0
    _
  %s5 = ssub.s32 1, %s3
  %s6 = scalar_select 0, %s5, %s3
  $region1: #{tensor_quantizer_forward.1} parent=0
    #allocation2 [shape = 'u8[512]{0}', space=smem, size = 0x200, scoped, tag = 'input window, operand 0, single buffered']
    #allocation3 [shape = 's32[1]{0}', space=sflag, size = 0x4, scoped, tag = 'scoped memory for tensor_quantizer_forward.1']
    %7 = vsyncpa [#allocation3], 0
    // Predicated region
    $region2: #{tensor_quantizer_forward.1} parent=1 // pred_check
      _
    $region3: #{tensor_quantizer_forward.1} parent=1 // pred_check_branch
      %9 = sbr.rel (0) target = $region5
    $region4: #{tensor_quantizer_forward.1} parent=1 // pred_region
      %11 = vsyncadd [#allocation3], 0
      %s13 = sshll.u32 %s0, 4
      %s14 = int_to_ptr.vmem [resolvable:$true] %s13
      %16 = dma.vmem_to_smem %s14, 16, [#allocation2], [#allocation3]
    $region5: #{tensor_quantizer_forward.1} parent=1 // pred_fallthru
      _
    // Predicated region
    $region6: #{tensor_quantizer_forward.1} parent=1 // pred_check
      _
    $region7: #{tensor_quantizer_forward.1} parent=1 // pred_check_branch
      %18 = sbr.rel (0) target = $region9
    $region8: #{tensor_quantizer_forward.1} parent=1 // pred_region
      _
    $region9: #{tensor_quantizer_forward.1} parent=1 // pred_fallthru
      _
    // Predicated region
    $region10: #{tensor_quantizer_forward.1} parent=1 // pred_check
      _
    $region11: #{tensor_quantizer_forward.1} parent=1 // pred_check_branch
      %20 = sbr.rel (0) target = $region13
    $region12: #{tensor_quantizer_forward.1} parent=1 // pred_region
      %22 = dma.done [#allocation3], 16
    $region13: #{tensor_quantizer_forward.1} parent=1 // pred_fallthru
      _
    %23 = sfence
    %s24 = sld [smem:[#allocation2]]
    %s25 = sld [smem:[#allocation2 + $0x1]]
    %v26 = vld [vmem:[%s1] sm:$0xff]
    %v27 = vld [vmem:[%s1 + $0x8] sm:$0xff]
    %v28 = vstv %s24
    %v29 = vmul.f32 %v26, %v28
    %v30 = vmul.f32 %v27, %v28
    %v31 = vround.ne.pseudo %v29
    %v32 = vround.ne.pseudo %v30
    %v33 = vmax.f32 %v31, -127.0
    %v34 = vmax.f32 %v32, -127.0
    %v35 = vmin.f32 %v33, 127.0
    %v36 = vmin.f32 %v34, 127.0
    %v37 = vstv %s25
    %v38 = vmul.f32 %v35, %v37
    %v39 = vmul.f32 %v36, %v37
    %40 = vst [vmem:[%s2] sm:$0xff] %v38
    %41 = vst [vmem:[%s2 + $0x8] sm:$0xff] %v39
    // Predicated region
    $region14: #{tensor_quantizer_forward.1} parent=1 // pred_check
      _
    $region15: #{tensor_quantizer_forward.1} parent=1 // pred_check_branch
      %43 = sbr.rel (0) target = $region17
    $region16: #{tensor_quantizer_forward.1} parent=1 // pred_region
      _
    $region17: #{tensor_quantizer_forward.1} parent=1 // pred_fallthru
      _
    // Predicated region
    $region18: #{tensor_quantizer_forward.1} parent=1 // pred_check
      _
    $region19: #{tensor_quantizer_forward.1} parent=1 // pred_check_branch
      %45 = sbr.rel (0) target = $region21
    $region20: #{tensor_quantizer_forward.1} parent=1 // pred_region
      _
    $region21: #{tensor_quantizer_forward.1} parent=1 // pred_fallthru
      _
    %46 = vsyncpa [#allocation3], 1

</llo_original>
